<compile_context>
chip_gen: v5e
topology: v5e:2x2
jax: 0.10.0
libtpu: 0.0.40
codegen_flags: <defaults>
</compile_context>

<pallas_src>
import functools

import jax
import jax.numpy as jnp
from jax.experimental import pallas as pl
from jax.experimental.pallas import tpu as pltpu

_LANE = 128        # TPU lane width (last dim)
_BF16_PACK = 16    # bf16 sublane packing: one bf16 vreg is [16, 128]


def _round_up(x, m):
    return ((x + m - 1) // m) * m


def _supports_pipeline_mode():
    """Detect whether this JAX exposes BlockSpec(pipeline_mode=pl.Buffered(k))."""
    try:
        pl.BlockSpec((8, _LANE), lambda i: (0, 0),
                     pipeline_mode=pl.Buffered(buffer_count=1))
        return True
    except (AttributeError, TypeError):
        return False


_SINGLE_BUFFER_PARAMS = _supports_pipeline_mode()


# ----------------------------------------------------------------------------
# Kernel body
# ----------------------------------------------------------------------------
def _mlp_kernel(n_layers, x_ref, *refs):
    """Fused MLP forward for one batch tile.

    refs = (w_0, b_0, w_1, b_1, ..., w_{L-1}, b_{L-1}, out_ref)
      x_ref : [tile, in_pad]    bf16
      w_l   : [in_pad, out_pad] bf16  (full array, VMEM-resident across grid)
      b_l   : [1, out_pad]      f32
      out   : [tile, out_pad]   bf16  (lane-dense, unmasked stores)
    """
    out_ref = refs[-1]
    param_refs = refs[:-1]

    h = x_ref[...]                                            # bf16 MXU operand
    for layer in range(n_layers):
        w = param_refs[2 * layer][...]                        # bf16 [in_pad, out_pad]
        b = param_refs[2 * layer + 1][...]                    # f32  [1, out_pad]
        acc = jnp.dot(h, w, preferred_element_type=jnp.float32) + b   # f32 accum
        if layer < n_layers - 1:
            acc = jnp.maximum(acc, 0.0)                       # ReLU in f32
            # TODO(synk): nn.Dropout is identity in eval mode; training-mode
            # dropout would need pltpu.prng_seed/prng_random_bits + 1/(1-p) scale.
            h = acc.astype(jnp.bfloat16)                      # back to bf16 for MXU
        else:
            out_ref[...] = jax.nn.sigmoid(acc).astype(out_ref.dtype)


# ----------------------------------------------------------------------------
# One-time parameter preparation (hoisted out of the per-call forward path)
# ----------------------------------------------------------------------------
def prepare_mlp_params(params):
    """Pad every feature dim to the MXU-friendly alignment and cast to bf16.

    params: list of (W [in, out], b [1, out]) float32 (W transposed vs. PyTorch).
    Run ONCE; the result is reused by every mlp_forward call.
    """
    sizes = [params[0][0].shape[0]] + [w.shape[1] for w, _ in params]
    # 256-wide K/N feeds the full 256x256 MXU on v6e/v7x once compute-bound;
    # for tiny feature dims stay at 128 so padded FLOPs/bytes don't dominate.
    align = 256 if max(sizes) >= 512 else _LANE

    flat_params, layer_shapes = [], []
    for w, b in params:
        fi, fo = w.shape
        fi_p, fo_p = _round_up(fi, align), _round_up(fo, align)
        w_p = jnp.zeros((fi_p, fo_p), jnp.bfloat16).at[:fi, :fo].set(
            w.astype(jnp.bfloat16))
        b_p = jnp.zeros((1, fo_p), jnp.float32).at[:, :fo].set(
            b.reshape(1, -1).astype(jnp.float32))
        flat_params.extend([w_p, b_p])
        layer_shapes.append((fi_p, fo_p))

    return {
        "flat_params": flat_params,
        "layer_shapes": layer_shapes,
        "n_layers": len(params),
        "in_size": sizes[0],
        "out_size": sizes[-1],
        "f_pad": layer_shapes[0][0],
        "out_pad": layer_shapes[-1][1],
        "param_bytes": sum(int(p.size) * p.dtype.itemsize for p in flat_params),
    }


# ----------------------------------------------------------------------------
# Forward wrapper
# ----------------------------------------------------------------------------
def mlp_forward(x, prep, *, batch_tile=512, vmem_budget_bytes=40 << 20):
    """Run the fused MLP Pallas kernel.

    x:    [B, input_size] float32
    prep: output of prepare_mlp_params
    returns [B, output_size] float32 sigmoid activations.
    """
    B, F = x.shape
    assert F == prep["in_size"], "input feature size mismatch vs prepared params"

    n_layers = prep["n_layers"]
    flat_params = prep["flat_params"]
    f_pad, out_pad, out_size = prep["f_pad"], prep["out_pad"], prep["out_size"]
    param_bytes = prep["param_bytes"]
    max_pad = max(max(s) for s in prep["layer_shapes"])

    # ---- Batch tile: multiple of 16 (bf16 sublane packing), large by default.
    tile = max(_BF16_PACK,
               _round_up(min(batch_tile, _round_up(B, _BF16_PACK)), _BF16_PACK))
    # Prefer >= 2 grid steps when B allows, so v7x's two TensorCores both work.
    if tile >= _round_up(B, _BF16_PACK) and B > _BF16_PACK:
        tile = max(_BF16_PACK, _round_up(pl.cdiv(B, 2), _BF16_PACK))

    def _tile_vmem(t):
        io = 2 * (t * f_pad * 2 + t * out_pad * 2)    # x + out tiles, double-buffered, bf16
        inter = t * max_pad * (4 + 2)                 # f32 acc + bf16 h of the widest layer
        return io + inter

    # Params are single-buffered when supported (grid-invariant index_map).
    param_resident = param_bytes if _SINGLE_BUFFER_PARAMS else 2 * param_bytes

    # Cap the tile so the whole working set fits the per-generation VMEM budget
    # (v7x: 64 MiB physical / 32 MiB scoped default).
    while tile > _BF16_PACK and _tile_vmem(tile) + param_resident > vmem_budget_bytes:
        tile = max(_BF16_PACK, _round_up(tile // 2, _BF16_PACK))

    b_pad = _round_up(B, tile)
    x_p = jnp.zeros((b_pad, f_pad), jnp.bfloat16).at[:B, :F].set(
        x.astype(jnp.bfloat16))

    # ---- BlockSpecs -------------------------------------------------------
    in_specs = [pl.BlockSpec((tile, f_pad), lambda i: (i, 0))]
    for p in flat_params:
        idx_map = lambda i, _nd=p.ndim: (0,) * _nd     # bind ndim at loop time
        if _SINGLE_BUFFER_PARAMS:
            in_specs.append(pl.BlockSpec(p.shape, idx_map,
                                         pipeline_mode=pl.Buffered(buffer_count=1)))
        else:
            in_specs.append(pl.BlockSpec(p.shape, idx_map))
    out_spec = pl.BlockSpec((tile, out_pad), lambda i: (i, 0))
    # NOTE: weights are fully VMEM-resident; for very large hidden dims (padded
    # params > ~half of v7x VMEM) one would tile the N dimension per layer with
    # an extra grid axis instead -- not needed at these sizes.

    # ---- Accurate VMEM request + cost estimate ----------------------------
    vmem_limit = _tile_vmem(tile) + param_resident + (4 << 20)   # + headroom
    vmem_limit = int(min(48 << 20, max(16 << 20, vmem_limit)))   # safe v5e..v7x

    flops = 2 * b_pad * sum(fi * fo for fi, fo in prep["layer_shapes"])
    bytes_accessed = int(x_p.size) * 2 + param_bytes + b_pad * out_pad * 2
    cost = pl.CostEstimate(flops=int(flops),
                           transcendentals=int(b_pad * out_pad),
                           bytes_accessed=int(bytes_accessed))

    out_p = pl.pallas_call(
        functools.partial(_mlp_kernel, n_layers),
        out_shape=jax.ShapeDtypeStruct((b_pad, out_pad), jnp.bfloat16),
        grid=(b_pad // tile,),
        in_specs=in_specs,
        out_specs=out_spec,
        compiler_params=pltpu.CompilerParams(
            dimension_semantics=("parallel",),   # megacore-shardable batch axis
            vmem_limit_bytes=vmem_limit,
        ),
        cost_estimate=cost,
    )(x_p, *flat_params)

    # Strip batch/lane padding; return f32 like the PyTorch module.
    return out_p[:B, :out_size].astype(jnp.float32)


# ----------------------------------------------------------------------------
# Init + pure-JAX reference
# ----------------------------------------------------------------------------
def init_mlp_params(key, input_size, hidden_sizes, output_size):
    """Deterministic init mirroring nn.Linear shapes (stored as [in, out], f32)."""
    sizes = [input_size] + list(hidden_sizes) + [output_size]
    params = []
    for i in range(len(sizes) - 1):
        fan_in, fan_out = sizes[i], sizes[i + 1]
        key, kw, kb = jax.random.split(key, 3)
        bound = 1.0 / jnp.sqrt(fan_in)
        w = jax.random.uniform(kw, (fan_in, fan_out), jnp.float32, -bound, bound)
        b = jax.random.uniform(kb, (1, fan_out), jnp.float32, -bound, bound)
        params.append((w, b))
    return params


def mlp_reference(x, params, matmul_dtype=jnp.float32):
    """Pure-JAX reference (eval-mode forward).

    matmul_dtype=jnp.bfloat16 mirrors the kernel's precision policy
    (bf16 operands, f32 accumulation); jnp.float32 is the full-precision check.
    """
    h = x.astype(matmul_dtype)
    for i, (w, b) in enumerate(params):
        h = jnp.dot(h, w.astype(matmul_dtype),
                    preferred_element_type=jnp.float32) + b
        if i < len(params) - 1:
            h = jnp.maximum(h, 0.0)
            h = h.astype(matmul_dtype)
    return jax.nn.sigmoid(h)


if __name__ == "__main__":
    key = jax.random.PRNGKey(0)

    # Shapes consistent with the module: input_size = X_train.shape[1] -> 16,
    # hidden_sizes -> [32, 16], output_size = 1.  Batch 50 with tile 32
    # exercises the multi-step parallel grid and the batch-padding path.
    batch, input_size, hidden_sizes, output_size = 50, 16, [32, 16], 1

    key, kx = jax.random.split(key)
    x = jax.random.normal(kx, (batch, input_size), jnp.float32)
    params = init_mlp_params(key, input_size, hidden_sizes, output_size)

    prep = prepare_mlp_params(params)      # one-time pad/cast, hoisted out of forward
    out = mlp_forward(x, prep, batch_tile=32)
    out = jax.block_until_ready(out)
    assert out.shape == (batch, output_size)

    # Check vs a reference with the same bf16-matmul / f32-accum policy
    # (kernel output is bf16, so allow ~1 ulp of bf16 in [0,1]).
    ref_bf16 = mlp_reference(x, params, matmul_dtype=jnp.bfloat16)
    assert jnp.allclose(out, ref_bf16, atol=5e-3, rtol=5e-3), "mismatch vs bf16 reference"

    # Looser sanity check vs the full-f32 (PyTorch-semantics) reference.
    ref_f32 = mlp_reference(x, params, matmul_dtype=jnp.float32)
    assert jnp.allclose(out, ref_f32, atol=3e-2, rtol=3e-2), "mismatch vs f32 reference"

    print("KERNEL_OK")
</pallas_src>

<mosaic_0001>
module attributes {stable_mosaic.version = 11 : i64} {
  func.func @_mlp_kernel(%arg0: i32, %arg1: memref<32x128xbf16, #tpu.memory_space<vmem>>, %arg2: memref<128x128xbf16, #tpu.memory_space<vmem>>, %arg3: memref<1x128xf32, #tpu.memory_space<vmem>>, %arg4: memref<128x128xbf16, #tpu.memory_space<vmem>>, %arg5: memref<1x128xf32, #tpu.memory_space<vmem>>, %arg6: memref<128x128xbf16, #tpu.memory_space<vmem>>, %arg7: memref<1x128xf32, #tpu.memory_space<vmem>>, %arg8: memref<32x128xbf16, #tpu.memory_space<vmem>>) attributes {dimension_semantics = [#tpu.dimension_semantics<parallel>], iteration_bounds = array<i64: 2>, scalar_prefetch = 0 : i64, scratch_operands = 0 : i64, tpu.core_type = #tpu.core_type<tc>, window_params = [{transform_indices = @transform_0, window_bounds = array<i64: 32, 128>}, {pipeline_mode = #tpu.pipeline_mode<synchronous>, transform_indices = @transform_1, window_bounds = array<i64: 128, 128>}, {pipeline_mode = #tpu.pipeline_mode<synchronous>, transform_indices = @transform_2, window_bounds = array<i64: 1, 128>}, {pipeline_mode = #tpu.pipeline_mode<synchronous>, transform_indices = @transform_3, window_bounds = array<i64: 128, 128>}, {pipeline_mode = #tpu.pipeline_mode<synchronous>, transform_indices = @transform_4, window_bounds = array<i64: 1, 128>}, {pipeline_mode = #tpu.pipeline_mode<synchronous>, transform_indices = @transform_5, window_bounds = array<i64: 128, 128>}, {pipeline_mode = #tpu.pipeline_mode<synchronous>, transform_indices = @transform_6, window_bounds = array<i64: 1, 128>}, {transform_indices = @transform_7, window_bounds = array<i64: 32, 128>}]} {
    %c0 = arith.constant 0 : index
    %c0_0 = arith.constant 0 : index
    %0 = vector.load %arg1[%c0, %c0_0] : memref<32x128xbf16, #tpu.memory_space<vmem>>, vector<32x128xbf16>
    %c0_1 = arith.constant 0 : index
    %c0_2 = arith.constant 0 : index
    %1 = vector.load %arg2[%c0_1, %c0_2] : memref<128x128xbf16, #tpu.memory_space<vmem>>, vector<128x128xbf16>
    %c0_3 = arith.constant 0 : index
    %c0_4 = arith.constant 0 : index
    %2 = vector.load %arg3[%c0_3, %c0_4] : memref<1x128xf32, #tpu.memory_space<vmem>>, vector<1x128xf32>
    %cst = arith.constant dense<0.000000e+00> : vector<32x128xf32>
    %3 = tpu.matmul %0, %1, %cst {dimension_numbers = #tpu.dot_dimension_numbers<[1], [0], [0], [1], [0, 0, 1, 1], [], []>} : vector<32x128xbf16>, vector<128x128xbf16>, vector<32x128xf32> -> vector<32x128xf32>
    %4 = vector.broadcast %2 : vector<1x128xf32> to vector<32x128xf32>
    %5 = arith.addf %3, %4 : vector<32x128xf32>
    %cst_5 = arith.constant 0.000000e+00 : f32
    %6 = vector.broadcast %cst_5 : f32 to vector<32x128xf32>
    %7 = arith.maximumf %5, %6 : vector<32x128xf32>
    %8 = arith.truncf %7 : vector<32x128xf32> to vector<32x128xbf16>
    %c0_6 = arith.constant 0 : index
    %c0_7 = arith.constant 0 : index
    %9 = vector.load %arg4[%c0_6, %c0_7] : memref<128x128xbf16, #tpu.memory_space<vmem>>, vector<128x128xbf16>
    %c0_8 = arith.constant 0 : index
    %c0_9 = arith.constant 0 : index
    %10 = vector.load %arg5[%c0_8, %c0_9] : memref<1x128xf32, #tpu.memory_space<vmem>>, vector<1x128xf32>
    %cst_10 = arith.constant dense<0.000000e+00> : vector<32x128xf32>
    %11 = tpu.matmul %8, %9, %cst_10 {dimension_numbers = #tpu.dot_dimension_numbers<[1], [0], [0], [1], [0, 0, 1, 1], [], []>} : vector<32x128xbf16>, vector<128x128xbf16>, vector<32x128xf32> -> vector<32x128xf32>
    %12 = vector.broadcast %10 : vector<1x128xf32> to vector<32x128xf32>
    %13 = arith.addf %11, %12 : vector<32x128xf32>
    %cst_11 = arith.constant 0.000000e+00 : f32
    %14 = vector.broadcast %cst_11 : f32 to vector<32x128xf32>
    %15 = arith.maximumf %13, %14 : vector<32x128xf32>
    %16 = arith.truncf %15 : vector<32x128xf32> to vector<32x128xbf16>
    %c0_12 = arith.constant 0 : index
    %c0_13 = arith.constant 0 : index
    %17 = vector.load %arg6[%c0_12, %c0_13] : memref<128x128xbf16, #tpu.memory_space<vmem>>, vector<128x128xbf16>
    %c0_14 = arith.constant 0 : index
    %c0_15 = arith.constant 0 : index
    %18 = vector.load %arg7[%c0_14, %c0_15] : memref<1x128xf32, #tpu.memory_space<vmem>>, vector<1x128xf32>
    %cst_16 = arith.constant dense<0.000000e+00> : vector<32x128xf32>
    %19 = tpu.matmul %16, %17, %cst_16 {dimension_numbers = #tpu.dot_dimension_numbers<[1], [0], [0], [1], [0, 0, 1, 1], [], []>} : vector<32x128xbf16>, vector<128x128xbf16>, vector<32x128xf32> -> vector<32x128xf32>
    %20 = vector.broadcast %18 : vector<1x128xf32> to vector<32x128xf32>
    %21 = arith.addf %19, %20 : vector<32x128xf32>
    %22 = arith.negf %21 : vector<32x128xf32>
    %23 = math.exp %22 : vector<32x128xf32>
    %cst_17 = arith.constant 1.000000e+00 : f32
    %24 = vector.broadcast %cst_17 : f32 to vector<32x128xf32>
    %25 = arith.addf %24, %23 : vector<32x128xf32>
    %26 = arith.divf %24, %25 : vector<32x128xf32>
    %27 = arith.truncf %26 : vector<32x128xf32> to vector<32x128xbf16>
    %c0_18 = arith.constant 0 : index
    %c0_19 = arith.constant 0 : index
    %28 = vector.load %arg8[%c0_18, %c0_19] : memref<32x128xbf16, #tpu.memory_space<vmem>>, vector<32x128xbf16>
    tpu.vector_store %arg8[%c0_18, %c0_19], %27 {strides = array<i32>} : memref<32x128xbf16, #tpu.memory_space<vmem>>, vector<32x128xbf16>,
    return
  }
  func.func @transform_0(%arg0: i32) -> (i32, i32) {
    %c0_i32 = arith.constant 0 : i32
    %c0_i32_0 = arith.constant 0 : i32
    return %arg0, %c0_i32 : i32, i32
  }
  func.func @transform_1(%arg0: i32) -> (i32, i32) {
    %c0_i32 = arith.constant 0 : i32
    %c0_i32_0 = arith.constant 0 : i32
    %c0_i32_1 = arith.constant 0 : i32
    return %c0_i32, %c0_i32_0 : i32, i32
  }
  func.func @transform_2(%arg0: i32) -> (i32, i32) {
    %c0_i32 = arith.constant 0 : i32
    %c0_i32_0 = arith.constant 0 : i32
    %c0_i32_1 = arith.constant 0 : i32
    return %c0_i32, %c0_i32_0 : i32, i32
  }
  func.func @transform_3(%arg0: i32) -> (i32, i32) {
    %c0_i32 = arith.constant 0 : i32
    %c0_i32_0 = arith.constant 0 : i32
    %c0_i32_1 = arith.constant 0 : i32
    return %c0_i32, %c0_i32_0 : i32, i32
  }
  func.func @transform_4(%arg0: i32) -> (i32, i32) {
    %c0_i32 = arith.constant 0 : i32
    %c0_i32_0 = arith.constant 0 : i32
    %c0_i32_1 = arith.constant 0 : i32
    return %c0_i32, %c0_i32_0 : i32, i32
  }
  func.func @transform_5(%arg0: i32) -> (i32, i32) {
    %c0_i32 = arith.constant 0 : i32
    %c0_i32_0 = arith.constant 0 : i32
    %c0_i32_1 = arith.constant 0 : i32
    return %c0_i32, %c0_i32_0 : i32, i32
  }
  func.func @transform_6(%arg0: i32) -> (i32, i32) {
    %c0_i32 = arith.constant 0 : i32
    %c0_i32_0 = arith.constant 0 : i32
    %c0_i32_1 = arith.constant 0 : i32
    return %c0_i32, %c0_i32_0 : i32, i32
  }
  func.func @transform_7(%arg0: i32) -> (i32, i32) {
    %c0_i32 = arith.constant 0 : i32
    %c0_i32_0 = arith.constant 0 : i32
    return %arg0, %c0_i32 : i32, i32
  }
}

</mosaic_0001>

<llo_original>
// kernel: tpu_custom_call.1
$region0: #{tpu_custom_call.1}
  #allocation0 [shape = 'u32[]', space=smem, size = 0x4, offset = 0x4, fixed_abs, tag = 'smem constant byte address 0x4 - core index']
  #allocation1 [shape = 'u32[72,128]{1,0:T(1,128)}', space=vmem, size = 0x9000, scoped, tag = 'internal scratch']
  %s0 = inlined_call_operand.hbm [shape: bf16[64,128], index: 0, kind: input, shape index: {}]
  %s1 = inlined_call_operand.hbm [shape: bf16[128,128], index: 1, kind: input, shape index: {}]
  %s2 = inlined_call_operand.vmem [shape: f32[1,128], index: 2, kind: input, shape index: {}]
  %s3 = inlined_call_operand.hbm [shape: bf16[128,128], index: 3, kind: input, shape index: {}]
  %s4 = inlined_call_operand.vmem [shape: f32[1,128], index: 4, kind: input, shape index: {}]
  %s5 = inlined_call_operand.hbm [shape: bf16[128,128], index: 5, kind: input, shape index: {}]
  %s6 = inlined_call_operand.vmem [shape: f32[1,128], index: 6, kind: input, shape index: {}]
  %s7 = inlined_call_operand.hbm [shape: bf16[64,128], index: 7, kind: output, shape index: {}]
  %s8 = sld [smem:[#allocation0]]
  $region77: #{tpu_custom_call.1} parent=0
    _
  %s10 = ssub.s32 1, %s8
  %s11 = scalar_select 0, %s10, %s8
  $region1: #{tpu_custom_call.1} parent=0
    #allocation2 [shape = 'u8[16384]{0}', space=vmem, size = 0x4000, scoped, tag = 'input window, operand 0']
    #allocation3 [shape = 's32[2]{0}', space=sflag, size = 0x8, scoped, tag = 'scoped memory for tpu_custom_call.1']
    #allocation4 [shape = 's32[2]{0}', space=sflag, size = 0x8, scoped, tag = 'scoped memory for tpu_custom_call.1']
    #allocation5 [shape = 'u8[32768]{0}', space=vmem, size = 0x8000, scoped, tag = 'input window, operand 1, single buffered']
    #allocation6 [shape = 's32[1]{0}', space=sflag, size = 0x4, scoped, tag = 'scoped memory for tpu_custom_call.1']
    #allocation7 [shape = 'u8[32768]{0}', space=vmem, size = 0x8000, scoped, tag = 'input window, operand 3, single buffered']
    #allocation8 [shape = 'u8[32768]{0}', space=vmem, size = 0x8000, scoped, tag = 'input window, operand 5, single buffered']
    #allocation9 [shape = 's32[1]{0}', space=sflag, size = 0x4, scoped, tag = 'scoped memory for tpu_custom_call.1']
    #allocation10 [shape = 'u8[16384]{0}', space=vmem, size = 0x4000, scoped, tag = 'output window, operand 0']
    %12 = vsyncpa [#allocation3], 0
    %s13 = scalar_lea.sflag [#allocation3], 1
    %14 = vsyncpa %s13, 0
    %15 = vsyncpa [#allocation6], 0
    %16 = vsyncpa [#allocation9], 0
    %17 = vsyncpa [#allocation4], 0
    %s18 = scalar_lea.sflag [#allocation4], 1
    %19 = vsyncpa %s18, 0
    loop: start=0, step=1, limit=4
    $region2: #{tpu_custom_call.1} parent=1 // loop_pre_header
      _
    $region3: #{tpu_custom_call.1} parent=1 // loop_header
      %s21 = sphi 0, %s25
      %p22 = scmp.ge.s32.totalorder %s21, 4
      %s31 = sphi 0, %s33
      %s34 = sphi 0, %s31
      %s35 = sphi 0, %s34
      %s51 = sphi 0, %s35
      %s55 = sphi 0, %s55
      %s57 = sphi 0, %s55
      %s58 = sphi 0, %s57
      %s72 = sphi 0, %s58
      %s76 = sphi 0, %s76
      %s78 = sphi 0, %s76
      %s79 = sphi 0, %s78
      %s93 = sphi 0, %s79
      %s97 = sphi 0, %s97
      %s99 = sphi 0, %s97
      %s100 = sphi 0, %s99
      %s114 = sphi 0, %s100
      %s118 = sphi 0, %s118
      %s120 = sphi 0, %s118
      %s121 = sphi 0, %s120
      %s135 = sphi 0, %s121
      %s139 = sphi 0, %s139
      %s141 = sphi 0, %s139
      %s142 = sphi 0, %s141
      %s156 = sphi 0, %s142
      %s160 = sphi 0, %s160
      %s162 = sphi 0, %s160
      %s163 = sphi 0, %s162
      %s177 = sphi 0, %s163
      %s183 = sphi 0, %s185
      %s186 = sphi 0, %s183
      %s187 = sphi 0, %s186
      %s203 = sphi 0, %s187
    $region4: #{tpu_custom_call.1} parent=1 // loop_header_branch
      %24 = sbr.rel (%p22) target = $region8
    $region5: #{tpu_custom_call.1} parent=1 // loop_body
      %s26 = ssub.s32 %s21, 1
      %s27 = ssub.s32 %s21, 2
      %s28 = sadd.s32 %s21, 1
      %s29 = ssub.s32 %s21, %s28
      %p30 = scmp.eq.s32.totalorder %s29, 0
      %s32 = sadd.s32 %s31, 1
      %s33 = scalar_select %p30, %s31, %s32
      %p36 = pneg %p30
      %p37 = scmp.eq.s32.totalorder %s21, 1
      %p38 = por %p36, %p37
      %p39 = scmp.ne.s32.totalorder %s31, %s34
      %p40 = scmp.eq.s32.totalorder %s21, 0
      %p41 = por %p39, %p40
      %p42 = scmp.ne.s32.totalorder %s31, %s34
      %p43 = scmp.eq.s32.totalorder %s26, 1
      %p44 = por %p42, %p43
      %p45 = scmp.ne.s32.totalorder %s34, %s35
      %p46 = scmp.eq.s32.totalorder %s26, 0
      %p47 = por %p45, %p46
      %p48 = scmp.ne.s32.totalorder %s34, %s35
      %p49 = scmp.eq.s32.totalorder %s27, 1
      %p50 = por %p48, %p49
      %p52 = scmp.ne.s32.totalorder %s35, %s51
      %p53 = scmp.eq.s32.totalorder %s27, 0
      %p54 = por %p52, %p53
      %s56 = sadd.s32 %s55, 1
      %p59 = scmp.eq.s32.totalorder %s21, 1
      %p60 = scmp.ne.s32.totalorder %s55, %s57
      %p61 = scmp.eq.s32.totalorder %s21, 0
      %p62 = por %p60, %p61
      %p63 = scmp.ne.s32.totalorder %s55, %s57
      %p64 = scmp.eq.s32.totalorder %s26, 1
      %p65 = por %p63, %p64
      %p66 = scmp.ne.s32.totalorder %s57, %s58
      %p67 = scmp.eq.s32.totalorder %s26, 0
      %p68 = por %p66, %p67
      %p69 = scmp.ne.s32.totalorder %s57, %s58
      %p70 = scmp.eq.s32.totalorder %s27, 1
      %p71 = por %p69, %p70
      %p73 = scmp.ne.s32.totalorder %s58, %s72
      %p74 = scmp.eq.s32.totalorder %s27, 0
      %p75 = por %p73, %p74
      %s77 = sadd.s32 %s76, 1
      %p80 = scmp.eq.s32.totalorder %s21, 1
      %p81 = scmp.ne.s32.totalorder %s76, %s78
      %p82 = scmp.eq.s32.totalorder %s21, 0
      %p83 = por %p81, %p82
      %p84 = scmp.ne.s32.totalorder %s76, %s78
      %p85 = scmp.eq.s32.totalorder %s26, 1
      %p86 = por %p84, %p85
      %p87 = scmp.ne.s32.totalorder %s78, %s79
      %p88 = scmp.eq.s32.totalorder %s26, 0
      %p89 = por %p87, %p88
      %p90 = scmp.ne.s32.totalorder %s78, %s79
      %p91 = scmp.eq.s32.totalorder %s27, 1
      %p92 = por %p90, %p91
      %p94 = scmp.ne.s32.totalorder %s79, %s93
      %p95 = scmp.eq.s32.totalorder %s27, 0
      %p96 = por %p94, %p95
      %s98 = sadd.s32 %s97, 1
      %p101 = scmp.eq.s32.totalorder %s21, 1
      %p102 = scmp.ne.s32.totalorder %s97, %s99
      %p103 = scmp.eq.s32.totalorder %s21, 0
      %p104 = por %p102, %p103
      %p105 = scmp.ne.s32.totalorder %s97, %s99
      %p106 = scmp.eq.s32.totalorder %s26, 1
      %p107 = por %p105, %p106
      %p108 = scmp.ne.s32.totalorder %s99, %s100
      %p109 = scmp.eq.s32.totalorder %s26, 0
      %p110 = por %p108, %p109
      %p111 = scmp.ne.s32.totalorder %s99, %s100
      %p112 = scmp.eq.s32.totalorder %s27, 1
      %p113 = por %p111, %p112
      %p115 = scmp.ne.s32.totalorder %s100, %s114
      %p116 = scmp.eq.s32.totalorder %s27, 0
      %p117 = por %p115, %p116
      %s119 = sadd.s32 %s118, 1
      %p122 = scmp.eq.s32.totalorder %s21, 1
      %p123 = scmp.ne.s32.totalorder %s118, %s120
      %p124 = scmp.eq.s32.totalorder %s21, 0
      %p125 = por %p123, %p124
      %p126 = scmp.ne.s32.totalorder %s118, %s120
      %p127 = scmp.eq.s32.totalorder %s26, 1
      %p128 = por %p126, %p127
      %p129 = scmp.ne.s32.totalorder %s120, %s121
      %p130 = scmp.eq.s32.totalorder %s26, 0
      %p131 = por %p129, %p130
      %p132 = scmp.ne.s32.totalorder %s120, %s121
      %p133 = scmp.eq.s32.totalorder %s27, 1
      %p134 = por %p132, %p133
      %p136 = scmp.ne.s32.totalorder %s121, %s135
      %p137 = scmp.eq.s32.totalorder %s27, 0
      %p138 = por %p136, %p137
      %s140 = sadd.s32 %s139, 1
      %p143 = scmp.eq.s32.totalorder %s21, 1
      %p144 = scmp.ne.s32.totalorder %s139, %s141
      %p145 = scmp.eq.s32.totalorder %s21, 0
      %p146 = por %p144, %p145
      %p147 = scmp.ne.s32.totalorder %s139, %s141
      %p148 = scmp.eq.s32.totalorder %s26, 1
      %p149 = por %p147, %p148
      %p150 = scmp.ne.s32.totalorder %s141, %s142
      %p151 = scmp.eq.s32.totalorder %s26, 0
      %p152 = por %p150, %p151
      %p153 = scmp.ne.s32.totalorder %s141, %s142
      %p154 = scmp.eq.s32.totalorder %s27, 1
      %p155 = por %p153, %p154
      %p157 = scmp.ne.s32.totalorder %s142, %s156
      %p158 = scmp.eq.s32.totalorder %s27, 0
      %p159 = por %p157, %p158
      %s161 = sadd.s32 %s160, 1
      %p164 = scmp.eq.s32.totalorder %s21, 1
      %p165 = scmp.ne.s32.totalorder %s160, %s162
      %p166 = scmp.eq.s32.totalorder %s21, 0
      %p167 = por %p165, %p166
      %p168 = scmp.ne.s32.totalorder %s160, %s162
      %p169 = scmp.eq.s32.totalorder %s26, 1
      %p170 = por %p168, %p169
      %p171 = scmp.ne.s32.totalorder %s162, %s163
      %p172 = scmp.eq.s32.totalorder %s26, 0
      %p173 = por %p171, %p172
      %p174 = scmp.ne.s32.totalorder %s162, %s163
      %p175 = scmp.eq.s32.totalorder %s27, 1
      %p176 = por %p174, %p175
      %p178 = scmp.ne.s32.totalorder %s163, %s177
      %p179 = scmp.eq.s32.totalorder %s27, 0
      %p180 = por %p178, %p179
      %s181 = ssub.s32 %s21, %s28
      %p182 = scmp.eq.s32.totalorder %s181, 0
      %s184 = sadd.s32 %s183, 1
      %s185 = scalar_select %p182, %s183, %s184
      %p188 = pneg %p182
      %p189 = scmp.eq.s32.totalorder %s21, 1
      %p190 = por %p188, %p189
      %p191 = scmp.ne.s32.totalorder %s183, %s186
      %p192 = scmp.eq.s32.totalorder %s21, 0
      %p193 = por %p191, %p192
      %p194 = scmp.ne.s32.totalorder %s183, %s186
      %p195 = scmp.eq.s32.totalorder %s26, 1
      %p196 = por %p194, %p195
      %p197 = scmp.ne.s32.totalorder %s186, %s187
      %p198 = scmp.eq.s32.totalorder %s26, 0
      %p199 = por %p197, %p198
      %p200 = scmp.ne.s32.totalorder %s186, %s187
      %p201 = scmp.eq.s32.totalorder %s27, 1
      %p202 = por %p200, %p201
      %p204 = scmp.ne.s32.totalorder %s187, %s203
      %p205 = scmp.eq.s32.totalorder %s27, 0
      %p206 = por %p204, %p205
      %p207 = scmp.le.s32.totalorder 1, %s21
      %p208 = scmp.lt.s32.totalorder %s21, 3
      %p209 = pnand %p207, %p208
      %p210 = pneg %p209
      // Predicated region
      $region9: #{tpu_custom_call.1} parent=5 // pred_check
        _
      $region10: #{tpu_custom_call.1} parent=5 // pred_check_branch
        %212 = sbr.rel (%p209) target = $region12
      $region11: #{tpu_custom_call.1} parent=5 // pred_region
        %s213 = ssub.s32 %s21, 1
        // Predicated region
        $region13: #{tpu_custom_call.1} parent=11 // pred_check
          %p214 = pneg %p68
        $region14: #{tpu_custom_call.1} parent=11 // pred_check_branch
          %216 = sbr.rel (%p214) target = $region16
        $region15: #{tpu_custom_call.1} parent=11 // pred_region
          %218 = vsyncadd [#allocation6], 0
          %s219 = sshll.u32 %s1, 4
          %s220 = int_to_ptr.hbm [resolvable:$true] %s219
          %s221 = sshll.u32 [#allocation5], 4
          %s222 = int_to_ptr.vmem [resolvable:$true] %s221
          %227 = dma.hbm_to_vmem [thread:$0]  %s220, 1024, %s222, [#allocation6], 64, 64, 4
        $region16: #{tpu_custom_call.1} parent=11 // pred_fallthru
          _
        // Predicated region
        $region17: #{tpu_custom_call.1} parent=11 // pred_check
          %p228 = pneg %p89
        $region18: #{tpu_custom_call.1} parent=11 // pred_check_branch
          %230 = sbr.rel (%p228) target = $region20
        $region19: #{tpu_custom_call.1} parent=11 // pred_region
          _
        $region20: #{tpu_custom_call.1} parent=11 // pred_fallthru
          _
        // Predicated region
        $region21: #{tpu_custom_call.1} parent=11 // pred_check
          %p231 = pneg %p110
        $region22: #{tpu_custom_call.1} parent=11 // pred_check_branch
          %233 = sbr.rel (%p231) target = $region24
        $region23: #{tpu_custom_call.1} parent=11 // pred_region
          %235 = vsyncadd [#allocation6], 0
          %s236 = sshll.u32 %s3, 4
          %s237 = int_to_ptr.hbm [resolvable:$true] %s236
          %s238 = sshll.u32 [#allocation7], 4
          %s239 = int_to_ptr.vmem [resolvable:$true] %s238
          %244 = dma.hbm_to_vmem [thread:$0]  %s237, 1024, %s239, [#allocation6], 64, 64, 4
        $region24: #{tpu_custom_call.1} parent=11 // pred_fallthru
          _
        // Predicated region
        $region25: #{tpu_custom_call.1} parent=11 // pred_check
          %p245 = pneg %p131
        $region26: #{tpu_custom_call.1} parent=11 // pred_check_branch
          %247 = sbr.rel (%p245) target = $region28
        $region27: #{tpu_custom_call.1} parent=11 // pred_region
          _
        $region28: #{tpu_custom_call.1} parent=11 // pred_fallthru
          _
        // Predicated region
        $region29: #{tpu_custom_call.1} parent=11 // pred_check
          %p248 = pneg %p152
        $region30: #{tpu_custom_call.1} parent=11 // pred_check_branch
          %250 = sbr.rel (%p248) target = $region32
        $region31: #{tpu_custom_call.1} parent=11 // pred_region
          %252 = vsyncadd [#allocation9], 0
          %s253 = sshll.u32 %s5, 4
          %s254 = int_to_ptr.hbm [resolvable:$true] %s253
          %s255 = sshll.u32 [#allocation8], 4
          %s256 = int_to_ptr.vmem [resolvable:$true] %s255
          %261 = dma.hbm_to_vmem [thread:$0]  %s254, 1024, %s256, [#allocation9], 64, 64, 4
        $region32: #{tpu_custom_call.1} parent=11 // pred_fallthru
          _
        // Predicated region
        $region33: #{tpu_custom_call.1} parent=11 // pred_check
          %p262 = pneg %p173
        $region34: #{tpu_custom_call.1} parent=11 // pred_check_branch
          %264 = sbr.rel (%p262) target = $region36
        $region35: #{tpu_custom_call.1} parent=11 // pred_region
          _
        $region36: #{tpu_custom_call.1} parent=11 // pred_fallthru
          _
      $region12: #{tpu_custom_call.1} parent=5 // pred_fallthru
        _
      %p265 = scmp.lt.s32.totalorder %s21, 2
      // Predicated region
      $region37: #{tpu_custom_call.1} parent=5 // pred_check
        %p266 = pneg %p265
      $region38: #{tpu_custom_call.1} parent=5 // pred_check_branch
        %268 = sbr.rel (%p266) target = $region40
      $region39: #{tpu_custom_call.1} parent=5 // pred_region
        // Predicated region
        $region41: #{tpu_custom_call.1} parent=39 // pred_check
          %p269 = pneg %p41
        $region42: #{tpu_custom_call.1} parent=39 // pred_check_branch
          %271 = sbr.rel (%p269) target = $region44
        $region43: #{tpu_custom_call.1} parent=39 // pred_region
          %s272 = sand.u32 %s31, 1
          %s273 = scalar_lea.sflag [#allocation3], %s272
          %s274 = sand.u32 %s31, 1
          %s275 = smul.addr %s274, 16
          %s276 = scalar_lea.vmem [#allocation2], %s275
          %s277 = smul.u32 4, %s21
          %279 = vsyncadd %s273, 0
          %s280 = smul.addr %s277, 4
          %s281 = scalar_lea.hbm %s0, %s280
          %s282 = sshll.u32 %s281, 4
          %s283 = int_to_ptr.hbm [resolvable:$true] %s282
          %s284 = sshll.u32 %s276, 4
          %s285 = int_to_ptr.vmem [resolvable:$true] %s284
          %290 = dma.hbm_to_vmem [thread:$0]  %s283, 256, %s285, %s273, 64, 64, 4
        $region44: #{tpu_custom_call.1} parent=39 // pred_fallthru
          _
      $region40: #{tpu_custom_call.1} parent=5 // pred_fallthru
        _
      %p291 = scmp.le.s32.totalorder 1, %s21
      %p292 = scmp.lt.s32.totalorder %s21, 3
      %p293 = pnand %p291, %p292
      %p294 = pneg %p293
      // Predicated region
      $region45: #{tpu_custom_call.1} parent=5 // pred_check
        _
      $region46: #{tpu_custom_call.1} parent=5 // pred_check_branch
        %296 = sbr.rel (%p293) target = $region48
      $region47: #{tpu_custom_call.1} parent=5 // pred_region
        %s297 = ssub.s32 %s21, 1
        %s298 = sand.u32 %s34, 1
        %s299 = scalar_lea.sflag [#allocation3], %s298
        %s300 = sand.u32 %s34, 1
        %s301 = smul.addr %s300, 16
        %s302 = scalar_lea.vmem [#allocation2], %s301
        // Predicated region
        $region49: #{tpu_custom_call.1} parent=47 // pred_check
          %p303 = pneg %p47
        $region50: #{tpu_custom_call.1} parent=47 // pred_check_branch
          %305 = sbr.rel (%p303) target = $region52
        $region51: #{tpu_custom_call.1} parent=47 // pred_region
          %307 = dma.done %s299, 256
        $region52: #{tpu_custom_call.1} parent=47 // pred_fallthru
          _
        // Predicated region
        $region53: #{tpu_custom_call.1} parent=47 // pred_check
          %p308 = pneg %p68
        $region54: #{tpu_custom_call.1} parent=47 // pred_check_branch
          %310 = sbr.rel (%p308) target = $region56
        $region55: #{tpu_custom_call.1} parent=47 // pred_region
          %312 = dma.done [#allocation6], 1024
        $region56: #{tpu_custom_call.1} parent=47 // pred_fallthru
          _
        // Predicated region
        $region57: #{tpu_custom_call.1} parent=47 // pred_check
          %p313 = pneg %p110
        $region58: #{tpu_custom_call.1} parent=47 // pred_check_branch
          %315 = sbr.rel (%p313) target = $region60
        $region59: #{tpu_custom_call.1} parent=47 // pred_region
          %317 = dma.done [#allocation6], 1024
        $region60: #{tpu_custom_call.1} parent=47 // pred_fallthru
          _
        // Predicated region
        $region61: #{tpu_custom_call.1} parent=47 // pred_check
          %p318 = pneg %p152
        $region62: #{tpu_custom_call.1} parent=47 // pred_check_branch
          %320 = sbr.rel (%p318) target = $region64
        $region63: #{tpu_custom_call.1} parent=47 // pred_region
          %322 = dma.done [#allocation9], 1024
        $region64: #{tpu_custom_call.1} parent=47 // pred_fallthru
          _
        %s323 = sand.u32 %s34, 1
        %s324 = scalar_lea.sflag [#allocation3], %s323
        %s325 = sand.u32 %s34, 1
        %s326 = smul.addr %s325, 16
        %s327 = scalar_lea.vmem [#allocation2], %s326
        %p328 = pneg %p47
        %p329 = pneg %p44
        %p330 = pneg %p68
        %p331 = pneg %p65
        %p332 = pneg %p89
        %p333 = pneg %p86
        %p334 = pneg %p110
        %p335 = pneg %p107
        %p336 = pneg %p131
        %p337 = pneg %p128
        %p338 = pneg %p152
        %p339 = pneg %p149
        %p340 = pneg %p173
        %p341 = pneg %p170
        %p342 = pneg %p199
        %p343 = pneg %p196
        %s344 = sand.u32 %s186, 1
        %s345 = scalar_lea.sflag [#allocation4], %s344
        %s346 = sand.u32 %s186, 1
        %s347 = smul.addr %s346, 16
        %s348 = scalar_lea.vmem [#allocation10], %s347
        %s349 = smul.u32 4, %s26
        %s350 = smul.u32 4, %s26
        %v351 = vld [vmem:[%s302] sm:$0xf]
        %v352 = vld [vmem:[%s302 + $0x4] sm:$0xf]
        %v353 = vld [vmem:[%s302 + $0x8] sm:$0xf]
        %v354 = vld [vmem:[%s302 + $0xc] sm:$0xf]
        %v355 = vld [vmem:[#allocation5] sm:$0xf]
        %v356 = vld [vmem:[#allocation5 + $0x4] sm:$0xf]
        %v357 = vld [vmem:[#allocation5 + $0x8] sm:$0xf]
        %v358 = vld [vmem:[#allocation5 + $0xc] sm:$0xf]
        %v359 = vld [vmem:[#allocation5 + $0x10] sm:$0xf]
        %v360 = vld [vmem:[#allocation5 + $0x14] sm:$0xf]
        %v361 = vld [vmem:[#allocation5 + $0x18] sm:$0xf]
        %v362 = vld [vmem:[#allocation5 + $0x1c] sm:$0xf]
        %v363 = vld [vmem:[#allocation5 + $0x20] sm:$0xf]
        %v364 = vld [vmem:[#allocation5 + $0x24] sm:$0xf]
        %v365 = vld [vmem:[#allocation5 + $0x28] sm:$0xf]
        %v366 = vld [vmem:[#allocation5 + $0x2c] sm:$0xf]
        %v367 = vld [vmem:[#allocation5 + $0x30] sm:$0xf]
        %v368 = vld [vmem:[#allocation5 + $0x34] sm:$0xf]
        %v369 = vld [vmem:[#allocation5 + $0x38] sm:$0xf]
        %v370 = vld [vmem:[#allocation5 + $0x3c] sm:$0xf]
        %v371 = vld [vmem:[%s2] sm:$0x1]
        %v373 = vperm.slane %v371, 0
        %v379 = vunpack.c.l.b16 %v351
        %v380 = vunpack.c.l.b16 %v352
        %v381 = vunpack.c.l.b16 %v353
        %v382 = vunpack.c.l.b16 %v354
        %v383 = vpack.c.b16 %v380, %v379
        %v384 = vpack.c.b16 %v382, %v381
        %v403 = vunpack.c.l.b16 %v355
        %v404 = vunpack.c.l.b16 %v356
        %v405 = vunpack.c.l.b16 %v357
        %v406 = vunpack.c.l.b16 %v358
        %v407 = vunpack.c.l.b16 %v359
        %v408 = vunpack.c.l.b16 %v360
        %v409 = vunpack.c.l.b16 %v361
        %v410 = vunpack.c.l.b16 %v362
        %v411 = vunpack.c.l.b16 %v363
        %v412 = vunpack.c.l.b16 %v364
        %v413 = vunpack.c.l.b16 %v365
        %v414 = vunpack.c.l.b16 %v366
        %v415 = vunpack.c.l.b16 %v367
        %v416 = vunpack.c.l.b16 %v368
        %v417 = vunpack.c.l.b16 %v369
        %v418 = vunpack.c.l.b16 %v370
        %v419 = vpack.c.b16 %v404, %v403
        %v420 = vpack.c.b16 %v406, %v405
        %v421 = vpack.c.b16 %v408, %v407
        %v422 = vpack.c.b16 %v410, %v409
        %v423 = vpack.c.b16 %v412, %v411
        %v424 = vpack.c.b16 %v414, %v413
        %v425 = vpack.c.b16 %v416, %v415
        %v426 = vpack.c.b16 %v418, %v417
        %435 = vmatpush.bf16.msra.mxu0 %v426
        %436 = vmatpush.bf16.msra.mxu0 %v425
        %437 = vmatpush.bf16.msra.mxu0 %v424
        %438 = vmatpush.bf16.msra.mxu0 %v423
        %439 = vmatpush.bf16.msra.mxu0 %v422
        %440 = vmatpush.bf16.msra.mxu0 %v421
        %441 = vmatpush.bf16.msra.mxu0 %v420
        %442 = vmatpush.bf16.msra.mxu0 %v419
        %443 = vmatmul.bf16.gmra.mxu0 %v383
        %v444 = vpop.f32.mrf.mxu0
        %v445 = vadd.f32 %v373, %v444
        %v446 = vpop.f32.mrf.mxu0
        %v447 = vadd.f32 %v373, %v446
        %448 = vmatmul.bf16.gmra.mxu0 %v384
        %v449 = vpop.f32.mrf.mxu0
        %v450 = vadd.f32 %v373, %v449
        %v451 = vpop.f32.mrf.mxu0
        %v452 = vadd.f32 %v373, %v451
        %453 = vdwg.mxu0
        %v454 = vmax.f32 %v445, 0.0
        %v455 = vmax.f32 %v447, 0.0
        %v456 = vmax.f32 %v450, 0.0
        %v457 = vmax.f32 %v452, 0.0
        %v458 = vpack.c.bf16 %v455, %v454
        %v459 = vpack.c.bf16 %v457, %v456
        %v460 = vld [vmem:[#allocation7] sm:$0xf]
        %v461 = vld [vmem:[#allocation7 + $0x4] sm:$0xf]
        %v462 = vld [vmem:[#allocation7 + $0x8] sm:$0xf]
        %v463 = vld [vmem:[#allocation7 + $0xc] sm:$0xf]
        %v464 = vld [vmem:[#allocation7 + $0x10] sm:$0xf]
        %v465 = vld [vmem:[#allocation7 + $0x14] sm:$0xf]
        %v466 = vld [vmem:[#allocation7 + $0x18] sm:$0xf]
        %v467 = vld [vmem:[#allocation7 + $0x1c] sm:$0xf]
        %v468 = vld [vmem:[#allocation7 + $0x20] sm:$0xf]
        %v469 = vld [vmem:[#allocation7 + $0x24] sm:$0xf]
        %v470 = vld [vmem:[#allocation7 + $0x28] sm:$0xf]
        %v471 = vld [vmem:[#allocation7 + $0x2c] sm:$0xf]
        %v472 = vld [vmem:[#allocation7 + $0x30] sm:$0xf]
        %v473 = vld [vmem:[#allocation7 + $0x34] sm:$0xf]
        %v474 = vld [vmem:[#allocation7 + $0x38] sm:$0xf]
        %v475 = vld [vmem:[#allocation7 + $0x3c] sm:$0xf]
        %v476 = vld [vmem:[%s4] sm:$0x1]
        %v478 = vperm.slane %v476, 0
        %v496 = vunpack.c.l.b16 %v460
        %v497 = vunpack.c.l.b16 %v461
        %v498 = vunpack.c.l.b16 %v462
        %v499 = vunpack.c.l.b16 %v463
        %v500 = vunpack.c.l.b16 %v464
        %v501 = vunpack.c.l.b16 %v465
        %v502 = vunpack.c.l.b16 %v466
        %v503 = vunpack.c.l.b16 %v467
        %v504 = vunpack.c.l.b16 %v468
        %v505 = vunpack.c.l.b16 %v469
        %v506 = vunpack.c.l.b16 %v470
        %v507 = vunpack.c.l.b16 %v471
        %v508 = vunpack.c.l.b16 %v472
        %v509 = vunpack.c.l.b16 %v473
        %v510 = vunpack.c.l.b16 %v474
        %v511 = vunpack.c.l.b16 %v475
        %v512 = vpack.c.b16 %v497, %v496
        %v513 = vpack.c.b16 %v499, %v498
        %v514 = vpack.c.b16 %v501, %v500
        %v515 = vpack.c.b16 %v503, %v502
        %v516 = vpack.c.b16 %v505, %v504
        %v517 = vpack.c.b16 %v507, %v506
        %v518 = vpack.c.b16 %v509, %v508
        %v519 = vpack.c.b16 %v511, %v510
        %528 = vmatpush.bf16.msra.mxu0 %v519
        %529 = vmatpush.bf16.msra.mxu0 %v518
        %530 = vmatpush.bf16.msra.mxu0 %v517
        %531 = vmatpush.bf16.msra.mxu0 %v516
        %532 = vmatpush.bf16.msra.mxu0 %v515
        %533 = vmatpush.bf16.msra.mxu0 %v514
        %534 = vmatpush.bf16.msra.mxu0 %v513
        %535 = vmatpush.bf16.msra.mxu0 %v512
        %536 = vmatmul.bf16.gmra.mxu0 %v458
        %v537 = vpop.f32.mrf.mxu0
        %v538 = vadd.f32 %v478, %v537
        %v539 = vpop.f32.mrf.mxu0
        %v540 = vadd.f32 %v478, %v539
        %541 = vmatmul.bf16.gmra.mxu0 %v459
        %v542 = vpop.f32.mrf.mxu0
        %v543 = vadd.f32 %v478, %v542
        %v544 = vpop.f32.mrf.mxu0
        %v545 = vadd.f32 %v478, %v544
        %546 = vdwg.mxu0
        %v547 = vmax.f32 %v538, 0.0
        %v548 = vmax.f32 %v540, 0.0
        %v549 = vmax.f32 %v543, 0.0
        %v550 = vmax.f32 %v545, 0.0
        %v551 = vpack.c.bf16 %v548, %v547
        %v552 = vpack.c.bf16 %v550, %v549
        %v553 = vld [vmem:[#allocation8] sm:$0xf]
        %v554 = vld [vmem:[#allocation8 + $0x4] sm:$0xf]
        %v555 = vld [vmem:[#allocation8 + $0x8] sm:$0xf]
        %v556 = vld [vmem:[#allocation8 + $0xc] sm:$0xf]
        %v557 = vld [vmem:[#allocation8 + $0x10] sm:$0xf]
        %v558 = vld [vmem:[#allocation8 + $0x14] sm:$0xf]
        %v559 = vld [vmem:[#allocation8 + $0x18] sm:$0xf]
        %v560 = vld [vmem:[#allocation8 + $0x1c] sm:$0xf]
        %v561 = vld [vmem:[#allocation8 + $0x20] sm:$0xf]
        %v562 = vld [vmem:[#allocation8 + $0x24] sm:$0xf]
        %v563 = vld [vmem:[#allocation8 + $0x28] sm:$0xf]
        %v564 = vld [vmem:[#allocation8 + $0x2c] sm:$0xf]
        %v565 = vld [vmem:[#allocation8 + $0x30] sm:$0xf]
        %v566 = vld [vmem:[#allocation8 + $0x34] sm:$0xf]
        %v567 = vld [vmem:[#allocation8 + $0x38] sm:$0xf]
        %v568 = vld [vmem:[#allocation8 + $0x3c] sm:$0xf]
        %v569 = vld [vmem:[%s6] sm:$0x1]
        %v571 = vperm.slane %v569, 0
        %v589 = vunpack.c.l.b16 %v553
        %v590 = vunpack.c.l.b16 %v554
        %v591 = vunpack.c.l.b16 %v555
        %v592 = vunpack.c.l.b16 %v556
        %v593 = vunpack.c.l.b16 %v557
        %v594 = vunpack.c.l.b16 %v558
        %v595 = vunpack.c.l.b16 %v559
        %v596 = vunpack.c.l.b16 %v560
        %v597 = vunpack.c.l.b16 %v561
        %v598 = vunpack.c.l.b16 %v562
        %v599 = vunpack.c.l.b16 %v563
        %v600 = vunpack.c.l.b16 %v564
        %v601 = vunpack.c.l.b16 %v565
        %v602 = vunpack.c.l.b16 %v566
        %v603 = vunpack.c.l.b16 %v567
        %v604 = vunpack.c.l.b16 %v568
        %v605 = vpack.c.b16 %v590, %v589
        %v606 = vpack.c.b16 %v592, %v591
        %v607 = vpack.c.b16 %v594, %v593
        %v608 = vpack.c.b16 %v596, %v595
        %v609 = vpack.c.b16 %v598, %v597
        %v610 = vpack.c.b16 %v600, %v599
        %v611 = vpack.c.b16 %v602, %v601
        %v612 = vpack.c.b16 %v604, %v603
        %621 = vmatpush.bf16.msra.mxu0 %v612
        %622 = vmatpush.bf16.msra.mxu0 %v611
        %623 = vmatpush.bf16.msra.mxu0 %v610
        %624 = vmatpush.bf16.msra.mxu0 %v609
        %625 = vmatpush.bf16.msra.mxu0 %v608
        %626 = vmatpush.bf16.msra.mxu0 %v607
        %627 = vmatpush.bf16.msra.mxu0 %v606
        %628 = vmatpush.bf16.msra.mxu0 %v605
        %629 = vmatmul.bf16.gmra.mxu0 %v551
        %v630 = vpop.f32.mrf.mxu0
        %v631 = vadd.f32 %v571, %v630
        %v632 = vpop.f32.mrf.mxu0
        %v633 = vadd.f32 %v571, %v632
        %634 = vmatmul.bf16.gmra.mxu0 %v552
        %v635 = vpop.f32.mrf.mxu0
        %v636 = vadd.f32 %v571, %v635
        %v637 = vpop.f32.mrf.mxu0
        %v638 = vadd.f32 %v571, %v637
        %639 = vdwg.mxu0
        %v640 = vxor.u32 %v631, 2147483648
        %v641 = vxor.u32 %v633, 2147483648
        %v642 = vxor.u32 %v636, 2147483648
        %v643 = vxor.u32 %v638, 2147483648
        %v644 = vmul.f32 %v640, 1.442695
        %v645 = vpow.pop %v644
        %v646 = vmul.f32 %v641, 1.442695
        %v647 = vpow.pop %v646
        %v648 = vmul.f32 %v642, 1.442695
        %v649 = vpow.pop %v648
        %v650 = vmul.f32 %v643, 1.442695
        %v651 = vpow.pop %v650
        %v652 = vadd.f32 %v645, 1.0
        %v653 = vadd.f32 %v647, 1.0
        %v654 = vadd.f32 %v649, 1.0
        %v655 = vadd.f32 %v651, 1.0
        %v656 = vrcp.pop %v652
        %v657 = vmul.f32 %v652, %v656
        %v658 = vsub.f32 1.0, %v657
        %v659 = vmul.f32 %v656, %v658
        %v660 = vadd.f32 %v656, %v659
        %vm661 = vweird.f32 %v652
        %vm662 = vweird.f32 %v656
        %vm663 = vmor %vm661, %vm662
        %v664 = vsel %vm663, %v656, %v660
        %v665 = vand.u32 2147483647, %v652
        %vm666 = vcmp.eq.f32.partialorder %v665, 8.507059e+37
        %v667 = vand.u32 %v652, 2147483648
        %v668 = vor.u32 1.1754944e-38, %v667
        %v669 = vsel %vm666, %v668, %v664
        %v670 = vmul.f32 1.0, %v669
        %v671 = vrcp.pop %v653
        %v672 = vmul.f32 %v653, %v671
        %v673 = vsub.f32 1.0, %v672
        %v674 = vmul.f32 %v671, %v673
        %v675 = vadd.f32 %v671, %v674
        %vm676 = vweird.f32 %v653
        %vm677 = vweird.f32 %v671
        %vm678 = vmor %vm676, %vm677
        %v679 = vsel %vm678, %v671, %v675
        %v680 = vand.u32 2147483647, %v653
        %vm681 = vcmp.eq.f32.partialorder %v680, 8.507059e+37
        %v682 = vand.u32 %v653, 2147483648
        %v683 = vor.u32 1.1754944e-38, %v682
        %v684 = vsel %vm681, %v683, %v679
        %v685 = vmul.f32 1.0, %v684
        %v686 = vrcp.pop %v654
        %v687 = vmul.f32 %v654, %v686
        %v688 = vsub.f32 1.0, %v687
        %v689 = vmul.f32 %v686, %v688
        %v690 = vadd.f32 %v686, %v689
        %vm691 = vweird.f32 %v654
        %vm692 = vweird.f32 %v686
        %vm693 = vmor %vm691, %vm692
        %v694 = vsel %vm693, %v686, %v690
        %v695 = vand.u32 2147483647, %v654
        %vm696 = vcmp.eq.f32.partialorder %v695, 8.507059e+37
        %v697 = vand.u32 %v654, 2147483648
        %v698 = vor.u32 1.1754944e-38, %v697
        %v699 = vsel %vm696, %v698, %v694
        %v700 = vmul.f32 1.0, %v699
        %v701 = vrcp.pop %v655
        %v702 = vmul.f32 %v655, %v701
        %v703 = vsub.f32 1.0, %v702
        %v704 = vmul.f32 %v701, %v703
        %v705 = vadd.f32 %v701, %v704
        %vm706 = vweird.f32 %v655
        %vm707 = vweird.f32 %v701
        %vm708 = vmor %vm706, %vm707
        %v709 = vsel %vm708, %v701, %v705
        %v710 = vand.u32 2147483647, %v655
        %vm711 = vcmp.eq.f32.partialorder %v710, 8.507059e+37
        %v712 = vand.u32 %v655, 2147483648
        %v713 = vor.u32 1.1754944e-38, %v712
        %v714 = vsel %vm711, %v713, %v709
        %v715 = vmul.f32 1.0, %v714
        %v716 = vpack.c.bf16 %v670, %v670
        %v717 = vpack.c.bf16 %v685, %v685
        %v718 = vpack.c.bf16 %v700, %v700
        %v719 = vpack.c.bf16 %v715, %v715
        %720 = vst [vmem:[%s348] sm:$0xf] %v716
        %721 = vst [vmem:[%s348 + $0x4] sm:$0xf] %v717
        %722 = vst [vmem:[%s348 + $0x8] sm:$0xf] %v718
        %723 = vst [vmem:[%s348 + $0xc] sm:$0xf] %v719
        %s724 = sand.u32 %s186, 1
        %s725 = scalar_lea.sflag [#allocation4], %s724
        %s726 = sand.u32 %s186, 1
        %s727 = smul.addr %s726, 16
        %s728 = scalar_lea.vmem [#allocation10], %s727
        // Predicated region
        $region65: #{tpu_custom_call.1} parent=47 // pred_check
          %p729 = pneg %p196
        $region66: #{tpu_custom_call.1} parent=47 // pred_check_branch
          %731 = sbr.rel (%p729) target = $region68
        $region67: #{tpu_custom_call.1} parent=47 // pred_region
          %s732 = smul.u32 4, %s26
          %734 = vsyncadd %s725, 0
          %s735 = smul.addr %s732, 4
          %s736 = scalar_lea.hbm %s7, %s735
          %s737 = sshll.u32 %s728, 4
          %s738 = int_to_ptr.vmem [resolvable:$true] %s737
          %s739 = sshll.u32 %s736, 4
          %s740 = int_to_ptr.hbm [resolvable:$true] %s739
          %745 = dma.vmem_to_hbm [thread:$0]  %s738, 256, %s740, %s725, 64, 64, 4
        $region68: #{tpu_custom_call.1} parent=47 // pred_fallthru
          _
      $region48: #{tpu_custom_call.1} parent=5 // pred_fallthru
        _
      %p746 = scmp.le.s32.totalorder 2, %s21
      // Predicated region
      $region69: #{tpu_custom_call.1} parent=5 // pred_check
        %p747 = pneg %p746
      $region70: #{tpu_custom_call.1} parent=5 // pred_check_branch
        %749 = sbr.rel (%p747) target = $region72
      $region71: #{tpu_custom_call.1} parent=5 // pred_region
        %s750 = ssub.s32 %s21, 2
        // Predicated region
        $region73: #{tpu_custom_call.1} parent=71 // pred_check
          %p751 = pneg %p202
        $region74: #{tpu_custom_call.1} parent=71 // pred_check_branch
          %753 = sbr.rel (%p751) target = $region76
        $region75: #{tpu_custom_call.1} parent=71 // pred_region
          %s754 = sand.u32 %s187, 1
          %s755 = scalar_lea.sflag [#allocation4], %s754
          %s756 = sand.u32 %s187, 1
          %s757 = smul.addr %s756, 16
          %s758 = scalar_lea.vmem [#allocation10], %s757
          %760 = dma.done %s755, 256
        $region76: #{tpu_custom_call.1} parent=71 // pred_fallthru
          _
      $region72: #{tpu_custom_call.1} parent=5 // pred_fallthru
        _
    $region6: #{tpu_custom_call.1} parent=1 // loop_footer
      %s25 = sadd.s32 1, %s21
    $region7: #{tpu_custom_call.1} parent=1 // loop_footer_branch
      %20 = sbr.rel target = $region3
    $region8: #{tpu_custom_call.1} parent=1 // loop_exit
      _
    %761 = vsyncpa [#allocation3], 1
    %s762 = scalar_lea.sflag [#allocation3], 1
    %763 = vsyncpa %s762, 1
    %764 = vsyncpa [#allocation6], 1
    %765 = vsyncpa [#allocation9], 1
    %766 = vsyncpa [#allocation4], 1
    %s767 = scalar_lea.sflag [#allocation4], 1
    %768 = vsyncpa %s767, 1

</llo_original>
